<compile_context>
chip_gen: v7x
topology: tpu7x:2x2x1
jax: 0.10.0
libtpu: 0.0.40
codegen_flags: <defaults>
</compile_context>

<pallas_src>
import functools
import numpy as np
import jax
import jax.numpy as jnp
from jax.experimental import pallas as pl
from jax.experimental.pallas import tpu as pltpu


_ACT_GAIN = {"linear": 1.0, "relu": float(np.sqrt(2.0)), "lrelu": float(np.sqrt(2.0))}
_LRELU_SLOPE = 0.2


def _round_up(x, m):
    return (x + m - 1) // m * m


def _largest_aligned_divisor(dim, max_tile, align):
    """Largest multiple of `align` that divides `dim` and is <= max_tile;
    falls back to the full dim (always a legal BlockSpec size)."""
    if dim <= max_tile:
        return dim
    t = (max_tile // align) * align
    while t >= align:
        if dim % t == 0:
            return t
        t -= align
    return dim


def _epilogue(y, b_ref, *, acc_scale, bias_scale, activation, out_dtype):
    # y is the (tm, tn) f32 accumulator.  weight_gain and the bias_act output
    # gain are pre-folded into acc_scale / bias_scale; this is only valid for
    # positively homogeneous activations (linear / relu / lrelu).
    y = y * jnp.float32(acc_scale)
    if b_ref is not None:
        y = y + b_ref[...].astype(jnp.float32) * jnp.float32(bias_scale)
    if activation == "relu":
        y = jnp.maximum(y, 0.0)
    elif activation == "lrelu":
        y = jnp.where(y >= 0.0, y, jnp.float32(_LRELU_SLOPE) * y)
    # 'linear': identity.
    return y.astype(out_dtype)


def _fc_kernel_single_k(x_ref, w_ref, *rest, acc_scale, bias_scale, activation,
                        has_bias, compute_dtype):
    """Grid = (M_blocks, N_blocks); tk == K, so each step produces its output
    tile directly: no scratch accumulator, no init/finalize, no RMW."""
    if has_bias:
        b_ref, o_ref = rest
    else:
        (o_ref,) = rest
        b_ref = None
    y = jnp.dot(x_ref[...].astype(compute_dtype),
                w_ref[...].astype(compute_dtype),
                preferred_element_type=jnp.float32)
    o_ref[...] = _epilogue(y, b_ref, acc_scale=acc_scale, bias_scale=bias_scale,
                           activation=activation, out_dtype=o_ref.dtype)


def _fc_kernel_multi_k(x_ref, w_ref, *rest, acc_scale, bias_scale, activation,
                       has_bias, compute_dtype):
    """Grid = (M_blocks, N_blocks, K_blocks) with K innermost ("arbitrary");
    f32 VMEM accumulator, epilogue applied once on the last K step."""
    if has_bias:
        b_ref, o_ref, acc_ref = rest
    else:
        o_ref, acc_ref = rest
        b_ref = None

    k = pl.program_id(2)

    @pl.when(k == 0)
    def _():
        acc_ref[...] = jnp.zeros_like(acc_ref)

    acc_ref[...] += jnp.dot(x_ref[...].astype(compute_dtype),
                            w_ref[...].astype(compute_dtype),
                            preferred_element_type=jnp.float32)

    @pl.when(k == pl.num_programs(2) - 1)
    def _():
        o_ref[...] = _epilogue(acc_ref[...], b_ref, acc_scale=acc_scale,
                               bias_scale=bias_scale, activation=activation,
                               out_dtype=o_ref.dtype)


def prepare_fc_params(weight, bias=None, *, compute_dtype=jnp.bfloat16):
    """One-time parameter prep (call at init, reuse across forward calls):
      * transpose (out_features, in_features) -> (K, N) so the kernel's weight
        tile is lane-dense in N and jnp.dot needs no per-tile transpose,
      * cast to the MXU compute dtype (bf16 by default),
      * pad N up to a multiple of 128 so output stores are unmasked (tiny
        heads, e.g. a final logit, would otherwise hit masked vst.msk stores).
    Returns (w_kn, bias_row, out_features)."""
    weight = jnp.asarray(weight)
    n, _ = weight.shape
    n_pad = _round_up(max(n, 1), 128)
    w_kn = weight.T.astype(compute_dtype)                       # (K, N)
    if n_pad != n:
        w_kn = jnp.pad(w_kn, ((0, 0), (0, n_pad - n)))
    b_row = None
    if bias is not None:
        b_row = jnp.asarray(bias, jnp.float32).reshape(1, n)
        if n_pad != n:
            b_row = jnp.pad(b_row, ((0, 0), (0, n_pad - n)))
    return w_kn, b_row, n


def _tpu_vmem_bytes():
    # Conservative (v7x-sized) fallback if the query is unavailable.
    try:
        info = pltpu.get_tpu_info()
        cap = getattr(info, "vmem_capacity_bytes", None)
        if cap:
            return int(cap)
    except Exception:
        pass
    return 64 << 20


def fully_connected_layer(x, weight=None, bias=None, *, activation="linear",
                          lr_multiplier=1.0, compute_dtype=jnp.bfloat16,
                          prepared_params=None, tm=None, tn=None, tk=None):
    """Pallas equivalent of FullyConnectedLayer.forward.

    x:      (M, in_features)
    weight: (out_features, in_features)  (PyTorch convention); or pass
            prepared_params=prepare_fc_params(weight, bias, ...) to amortize
            the transpose / cast / pad across calls.
    bias:   (out_features,) or None
    """
    if activation not in _ACT_GAIN:
        # TODO(synk): other bias_act activations (tanh/sigmoid/elu/...) are not
        # wired up; they are not positively homogeneous, so the epilogue gain
        # pre-fold would also have to be removed for them.
        raise ValueError(f"unsupported activation: {activation}")

    if prepared_params is None:
        if weight is None:
            raise ValueError("pass either `weight` or `prepared_params`")
        prepared_params = prepare_fc_params(weight, bias,
                                            compute_dtype=compute_dtype)
    w_kn, b_row, n_out = prepared_params

    M, K = x.shape
    K2, n_pad = w_kn.shape
    assert K == K2, "in_features mismatch"
    has_bias = b_row is not None

    weight_gain = float(lr_multiplier) / float(np.sqrt(K))
    bias_gain = float(lr_multiplier)
    act_gain = _ACT_GAIN[activation]
    acc_scale = weight_gain * act_gain     # applied to the f32 accumulator
    bias_scale = bias_gain * act_gain      # applied to the f32 bias row

    # ---- generation-aware tile selection ------------------------------------
    vmem_bytes = _tpu_vmem_bytes()
    small_vmem = vmem_bytes <= (80 << 20)           # v7x-class (64 MiB) parts
    if small_vmem:
        tm_cap, tn_cap, tk_cap, vmem_limit = 256, 512, 2048, 48 << 20
    else:                                           # v5e / v6e: 128 MiB VMEM
        tm_cap, tn_cap, tk_cap, vmem_limit = 512, 1024, 2048, 96 << 20

    if tm is None:
        tm = M if M <= tm_cap else tm_cap
    if tn is None:
        tn = _largest_aligned_divisor(n_pad, tn_cap, 128)
    if tk is None:
        tk = _largest_aligned_divisor(K, tk_cap, 128)

    if small_vmem and pl.cdiv(M, tm) * (n_pad // tn) < 2:
        # v7x has 2 TensorCores: ensure the parallel axes expose >= 2 blocks so
        # megacore sharding has work to split (no-op on 1-TC v5e/v6e path).
        if n_pad // 128 >= 2:
            tn = _largest_aligned_divisor(n_pad, max(128, tn // 2), 128)
        elif M > 8:
            tm_half = max(8, _round_up(tm // 2, 8))
            if tm_half < M:
                tm = tm_half

    m_blocks = pl.cdiv(M, tm)       # ragged last M block handled by Pallas
    n_blocks = n_pad // tn
    k_blocks = K // tk
    single_k = (k_blocks == 1)

    itemsize = jnp.dtype(x.dtype).itemsize
    cost = pl.CostEstimate(
        flops=2 * M * n_pad * K,
        transcendentals=0,
        bytes_accessed=(x.size * itemsize
                        + w_kn.size * jnp.dtype(w_kn.dtype).itemsize
                        + (b_row.size * 4 if has_bias else 0)
                        + M * n_pad * itemsize),
    )

    kernel_kwargs = dict(acc_scale=acc_scale, bias_scale=bias_scale,
                         activation=activation, has_bias=has_bias,
                         compute_dtype=compute_dtype)

    if single_k:
        grid = (m_blocks, n_blocks)
        in_specs = [
            pl.BlockSpec((tm, tk), lambda i, j: (i, 0)),    # x tile
            pl.BlockSpec((tk, tn), lambda i, j: (0, j)),    # weight tile (K, N)
        ]
        operands = [x, w_kn]
        if has_bias:
            in_specs.append(pl.BlockSpec((1, tn), lambda i, j: (0, j)))
            operands.append(b_row)
        out_specs = pl.BlockSpec((tm, tn), lambda i, j: (i, j))
        scratch_shapes = []
        kernel = functools.partial(_fc_kernel_single_k, **kernel_kwargs)
        semantics = ("parallel", "parallel")
    else:
        grid = (m_blocks, n_blocks, k_blocks)
        in_specs = [
            pl.BlockSpec((tm, tk), lambda i, j, k: (i, k)),
            pl.BlockSpec((tk, tn), lambda i, j, k: (k, j)),
        ]
        operands = [x, w_kn]
        if has_bias:
            in_specs.append(pl.BlockSpec((1, tn), lambda i, j, k: (0, j)))
            operands.append(b_row)
        out_specs = pl.BlockSpec((tm, tn), lambda i, j, k: (i, j))
        scratch_shapes = [pltpu.VMEM((tm, tn), jnp.float32)]
        kernel = functools.partial(_fc_kernel_multi_k, **kernel_kwargs)
        semantics = ("parallel", "parallel", "arbitrary")

    out = pl.pallas_call(
        kernel,
        out_shape=jax.ShapeDtypeStruct((M, n_pad), x.dtype),
        grid_spec=pltpu.PrefetchScalarGridSpec(
            num_scalar_prefetch=0,
            grid=grid,
            in_specs=in_specs,
            out_specs=out_specs,
            scratch_shapes=scratch_shapes,
        ),
        compiler_params=pltpu.CompilerParams(
            dimension_semantics=semantics,
            vmem_limit_bytes=vmem_limit,
        ),
        cost_estimate=cost,
    )(*operands)

    # TODO(synk): optional fp8 weight path (per-output-channel scales folded
    # into the epilogue) for v7x inference is not implemented.
    return out if n_pad == n_out else out[:, :n_out]


def _reference(x, weight, bias, activation, lr_multiplier):
    """float64 numpy reference of the PyTorch forward (precision-independent)."""
    x64 = np.asarray(x, np.float64)
    w64 = np.asarray(weight, np.float64) * (lr_multiplier / np.sqrt(x.shape[1]))
    y = x64 @ w64.T
    if bias is not None:
        y = y + (np.asarray(bias, np.float64) * lr_multiplier)[None, :]
    if activation == "relu":
        y = np.maximum(y, 0.0) * np.sqrt(2.0)
    elif activation == "lrelu":
        y = np.where(y >= 0.0, y, 0.2 * y) * np.sqrt(2.0)
    return y.astype(np.float32)


if __name__ == "__main__":
    key = jax.random.PRNGKey(0)
    k_x, k_w, k_b, k_x2, k_w2, k_b2 = jax.random.split(key, 6)

    # Mapping-network-style FC at small shapes.
    batch, in_features, out_features = 8, 32, 64
    lr_multiplier = 0.01
    x = jax.random.normal(k_x, (batch, in_features), dtype=jnp.float32)
    weight = jax.random.normal(k_w, (out_features, in_features),
                               dtype=jnp.float32) / lr_multiplier
    bias = jax.random.normal(k_b, (out_features,), dtype=jnp.float32)

    # f32 compute path: tight match to the reference.
    for act in ("linear", "relu", "lrelu"):
        y = jax.block_until_ready(
            fully_connected_layer(x, weight, bias, activation=act,
                                  lr_multiplier=lr_multiplier,
                                  compute_dtype=jnp.float32))
        y_ref = _reference(x, weight, bias, act, lr_multiplier)
        np.testing.assert_allclose(np.asarray(y), y_ref, rtol=1e-4, atol=1e-4)

    # Default bf16-MXU path (f32 accumulation), with one-time prepared params.
    prepared = prepare_fc_params(weight, bias)       # bf16, (K, N), N padded
    y_bf = jax.block_until_ready(
        fully_connected_layer(x, prepared_params=prepared, activation="lrelu",
                              lr_multiplier=lr_multiplier))
    y_ref = _reference(x, weight, bias, "lrelu", lr_multiplier)
    np.testing.assert_allclose(np.asarray(y_bf), y_ref, rtol=1e-1, atol=1e-1)

    # No-bias path.
    y_nb = jax.block_until_ready(
        fully_connected_layer(x, weight, None, activation="lrelu",
                              lr_multiplier=lr_multiplier,
                              compute_dtype=jnp.float32))
    y_nb_ref = _reference(x, weight, None, "lrelu", lr_multiplier)
    np.testing.assert_allclose(np.asarray(y_nb), y_nb_ref, rtol=1e-4, atol=1e-4)

    # Tiled multi-block grid with K accumulation and a ragged last M block
    # (20 rows, tm=8 -> 3 M-blocks, no wrapper-side padding of the batch axis).
    M2, K2, N2 = 20, 256, 256
    x2 = jax.random.normal(k_x2, (M2, K2), dtype=jnp.float32)
    w2 = jax.random.normal(k_w2, (N2, K2), dtype=jnp.float32)
    b2 = jax.random.normal(k_b2, (N2,), dtype=jnp.float32)
    y2 = jax.block_until_ready(
        fully_connected_layer(x2, w2, b2, activation="lrelu", lr_multiplier=1.0,
                              compute_dtype=jnp.float32, tm=8, tn=128, tk=128))
    y2_ref = _reference(x2, w2, b2, "lrelu", 1.0)
    np.testing.assert_allclose(np.asarray(y2), y2_ref, rtol=1e-4, atol=1e-3)

    print("KERNEL_OK")
</pallas_src>

<mosaic_0001>
module attributes {stable_mosaic.version = 11 : i64} {
  func.func @_fc_kernel_single_k(%arg0: i32, %arg1: i32, %arg2: memref<8x32xf32, #tpu.memory_space<vmem>>, %arg3: memref<32x128xf32, #tpu.memory_space<vmem>>, %arg4: memref<1x128xf32, #tpu.memory_space<vmem>>, %arg5: memref<8x128xf32, #tpu.memory_space<vmem>>) attributes {dimension_semantics = [#tpu.dimension_semantics<parallel>, #tpu.dimension_semantics<parallel>], iteration_bounds = array<i64: 1, 1>, scalar_prefetch = 0 : i64, scratch_operands = 0 : i64, tpu.core_type = #tpu.core_type<tc>, window_params = [{transform_indices = @transform_0, window_bounds = array<i64: 8, 32>}, {transform_indices = @transform_1, window_bounds = array<i64: 32, 128>}, {transform_indices = @transform_2, window_bounds = array<i64: 1, 128>}, {transform_indices = @transform_3, window_bounds = array<i64: 8, 128>}]} {
    %c0 = arith.constant 0 : index
    %c0_0 = arith.constant 0 : index
    %0 = vector.load %arg2[%c0, %c0_0] : memref<8x32xf32, #tpu.memory_space<vmem>>, vector<8x32xf32>
    %c0_1 = arith.constant 0 : index
    %c0_2 = arith.constant 0 : index
    %1 = vector.load %arg3[%c0_1, %c0_2] : memref<32x128xf32, #tpu.memory_space<vmem>>, vector<32x128xf32>
    %cst = arith.constant dense<0.000000e+00> : vector<8x128xf32>
    %2 = tpu.matmul %0, %1, %cst {dimension_numbers = #tpu.dot_dimension_numbers<[1], [0], [0], [1], [0, 0, 1, 1], [], []>} : vector<8x32xf32>, vector<32x128xf32>, vector<8x128xf32> -> vector<8x128xf32>
    %cst_3 = arith.constant 0.00176776689 : f32
    %3 = vector.broadcast %cst_3 : f32 to vector<8x128xf32>
    %4 = arith.mulf %2, %3 : vector<8x128xf32>
    %c0_4 = arith.constant 0 : index
    %c0_5 = arith.constant 0 : index
    %5 = vector.load %arg4[%c0_4, %c0_5] : memref<1x128xf32, #tpu.memory_space<vmem>>, vector<1x128xf32>
    %cst_6 = arith.constant 0.00999999977 : f32
    %6 = vector.broadcast %cst_6 : f32 to vector<1x128xf32>
    %7 = arith.mulf %5, %6 : vector<1x128xf32>
    %8 = vector.broadcast %7 : vector<1x128xf32> to vector<8x128xf32>
    %9 = arith.addf %4, %8 : vector<8x128xf32>
    %c0_7 = arith.constant 0 : index
    %c0_8 = arith.constant 0 : index
    %10 = vector.load %arg5[%c0_7, %c0_8] : memref<8x128xf32, #tpu.memory_space<vmem>>, vector<8x128xf32>
    tpu.vector_store %arg5[%c0_7, %c0_8], %9 {strides = array<i32>} : memref<8x128xf32, #tpu.memory_space<vmem>>, vector<8x128xf32>,
    return
  }
  func.func @transform_0(%arg0: i32, %arg1: i32) -> (i32, i32) {
    %c0_i32 = arith.constant 0 : i32
    %c0_i32_0 = arith.constant 0 : i32
    return %arg0, %c0_i32 : i32, i32
  }
  func.func @transform_1(%arg0: i32, %arg1: i32) -> (i32, i32) {
    %c0_i32 = arith.constant 0 : i32
    %c0_i32_0 = arith.constant 0 : i32
    return %c0_i32, %arg1 : i32, i32
  }
  func.func @transform_2(%arg0: i32, %arg1: i32) -> (i32, i32) {
    %c0_i32 = arith.constant 0 : i32
    %c0_i32_0 = arith.constant 0 : i32
    return %c0_i32, %arg1 : i32, i32
  }
  func.func @transform_3(%arg0: i32, %arg1: i32) -> (i32, i32) {
    %c0_i32 = arith.constant 0 : i32
    return %arg0, %arg1 : i32, i32
  }
}

</mosaic_0001>

<llo_original>
// kernel: tpu_custom_call.1
$region0: #{tpu_custom_call.1}
  #allocation0 [shape = 'u32[]', space=smem, size = 0x4, offset = 0x4, fixed_abs, tag = 'smem constant byte address 0x4 - core index']
  #allocation1 [shape = 'u32[144,128]{1,0:T(1,128)}', space=vmem, size = 0x12000, scoped, tag = 'internal scratch']
  %s0 = inlined_call_operand.hbm [shape: f32[8,32], index: 0, kind: input, shape index: {}]
  %s1 = inlined_call_operand.hbm [shape: f32[32,128], index: 1, kind: input, shape index: {}]
  %s2 = inlined_call_operand.vmem [shape: f32[1,128], index: 2, kind: input, shape index: {}]
  %s3 = inlined_call_operand.hbm [shape: f32[8,128], index: 3, kind: output, shape index: {}]
  %s4 = sld [smem:[#allocation0]]
  $region30: #{tpu_custom_call.1} parent=0
    _
  %s6 = ssub.s32 1, %s4
  %s7 = scalar_select 0, %s6, %s4
  $region1: #{tpu_custom_call.1} parent=0
    #allocation2 [shape = 'u8[4096]{0}', space=vmem, size = 0x1000, scoped, tag = 'input window, operand 0, single buffered']
    #allocation3 [shape = 's32[1]{0}', space=sflag, size = 0x4, scoped, tag = 'scoped memory for tpu_custom_call.1']
    #allocation4 [shape = 's32[1]{0}', space=sflag, size = 0x4, scoped, tag = 'scoped memory for tpu_custom_call.1']
    #allocation5 [shape = 'u8[16384]{0}', space=vmem, size = 0x4000, scoped, tag = 'input window, operand 1, single buffered']
    #allocation6 [shape = 's32[1]{0}', space=sflag, size = 0x4, scoped, tag = 'scoped memory for tpu_custom_call.1']
    #allocation7 [shape = 'u8[4096]{0}', space=vmem, size = 0x1000, scoped, tag = 'output window, operand 0, single buffered']
    %8 = vsyncpa [#allocation3], 0
    %9 = vsyncpa [#allocation6], 0
    %10 = vsyncpa [#allocation4], 0
    // Predicated region
    $region2: #{tpu_custom_call.1} parent=1 // pred_check
      _
    $region3: #{tpu_custom_call.1} parent=1 // pred_check_branch
      %12 = sbr.rel (0) target = $region5
    $region4: #{tpu_custom_call.1} parent=1 // pred_region
      %s14 = ssub.s32 128, 128
      %15 = vsyncadd [#allocation3], %s14
      %s17 = sshll.u32 [#allocation2], 4
      %s18 = int_to_ptr.vmem [resolvable:$true] %s17
      %20 = dma.hbm_to_vmem [thread:$0]  %s0, 128, %s18, [#allocation3]
    $region5: #{tpu_custom_call.1} parent=1 // pred_fallthru
      _
    // Predicated region
    $region6: #{tpu_custom_call.1} parent=1 // pred_check
      _
    $region7: #{tpu_custom_call.1} parent=1 // pred_check_branch
      %22 = sbr.rel (0) target = $region9
    $region8: #{tpu_custom_call.1} parent=1 // pred_region
      %s24 = ssub.s32 512, 512
      %25 = vsyncadd [#allocation6], %s24
      %s26 = sshll.u32 [#allocation5], 4
      %s27 = int_to_ptr.vmem [resolvable:$true] %s26
      %32 = dma.hbm_to_vmem [thread:$0]  %s1, 512, %s27, [#allocation6], 128, 128, 8
    $region9: #{tpu_custom_call.1} parent=1 // pred_fallthru
      _
    // Predicated region
    $region10: #{tpu_custom_call.1} parent=1 // pred_check
      _
    $region11: #{tpu_custom_call.1} parent=1 // pred_check_branch
      %34 = sbr.rel (0) target = $region13
    $region12: #{tpu_custom_call.1} parent=1 // pred_region
      _
    $region13: #{tpu_custom_call.1} parent=1 // pred_fallthru
      _
    // Predicated region
    $region14: #{tpu_custom_call.1} parent=1 // pred_check
      _
    $region15: #{tpu_custom_call.1} parent=1 // pred_check_branch
      %36 = sbr.rel (0) target = $region17
    $region16: #{tpu_custom_call.1} parent=1 // pred_region
      %37 = dma.done [#allocation3], 128
    $region17: #{tpu_custom_call.1} parent=1 // pred_fallthru
      _
    // Predicated region
    $region18: #{tpu_custom_call.1} parent=1 // pred_check
      _
    $region19: #{tpu_custom_call.1} parent=1 // pred_check_branch
      %39 = sbr.rel (0) target = $region21
    $region20: #{tpu_custom_call.1} parent=1 // pred_region
      %40 = dma.done [#allocation6], 512
    $region21: #{tpu_custom_call.1} parent=1 // pred_fallthru
      _
    %v41 = vld [vmem:[#allocation2] sm:$0xff]
    %v42 = vld [vmem:[#allocation5] sm:$0xff]
    %v43 = vld [vmem:[#allocation5 + $0x8] sm:$0xff]
    %v44 = vld [vmem:[#allocation5 + $0x10] sm:$0xff]
    %v45 = vld [vmem:[#allocation5 + $0x18] sm:$0xff]
    %vm46 = vcmask 261120
    %v48 = vsel %vm46, %v41, 0
    %50 = vmatprep.subr.mxu0 0.0
    %51 = vmatpush1.msra.mxu0 %v42
    %52 = vmatprep.subr.mxu0 0.0
    %53 = vmatpush1.msra.mxu0 %v43
    %54 = vmatprep.subr.mxu0 0.0
    %55 = vmatpush1.msra.mxu0 %v44
    %56 = vmatprep.subr.mxu0 0.0
    %57 = vmatpush1.msra.mxu0 %v45
    %58 = vmatprep.subr.mxu0 0.0
    %59 = vmatpush1.msra.mxu0 0.0
    %60 = vmatprep.subr.mxu0 0.0
    %61 = vmatpush1.msra.mxu0 0.0
    %62 = vmatprep.subr.mxu0 0.0
    %63 = vmatpush1.msra.mxu0 0.0
    %64 = vmatprep.subr.mxu0 0.0
    %65 = vmatpush1.msra.mxu0 0.0
    %66 = vmatprep.subr.mxu0 0.0
    %67 = vmatpush1.msra.mxu0 0.0
    %68 = vmatprep.subr.mxu0 0.0
    %69 = vmatpush1.msra.mxu0 0.0
    %70 = vmatprep.subr.mxu0 0.0
    %71 = vmatpush1.msra.mxu0 0.0
    %72 = vmatprep.subr.mxu0 0.0
    %73 = vmatpush1.msra.mxu0 0.0
    %74 = vmatprep.subr.mxu0 0.0
    %75 = vmatpush1.msra.mxu0 0.0
    %76 = vmatprep.subr.mxu0 0.0
    %77 = vmatpush1.msra.mxu0 0.0
    %78 = vmatprep.subr.mxu0 0.0
    %79 = vmatpush1.msra.mxu0 0.0
    %80 = vmatprep.subr.mxu0 0.0
    %81 = vmatpush1.msra.mxu0 0.0
    %82 = vmatprep.subr.mxu0 0.0
    %83 = vmatpush1.msra.mxu0 0.0
    %84 = vmatprep.subr.mxu0 0.0
    %85 = vmatpush1.msra.mxu0 0.0
    %86 = vmatprep.subr.mxu0 0.0
    %87 = vmatpush1.msra.mxu0 0.0
    %88 = vmatprep.subr.mxu0 0.0
    %89 = vmatpush1.msra.mxu0 0.0
    %90 = vmatprep.subr.mxu0 0.0
    %91 = vmatpush1.msra.mxu0 0.0
    %92 = vmatprep.subr.mxu0 0.0
    %93 = vmatpush1.msra.mxu0 0.0
    %94 = vmatprep.subr.mxu0 0.0
    %95 = vmatpush1.msra.mxu0 0.0
    %96 = vmatprep.subr.mxu0 0.0
    %97 = vmatpush1.msra.mxu0 0.0
    %98 = vmatprep.subr.mxu0 0.0
    %99 = vmatpush1.msra.mxu0 0.0
    %100 = vmatprep.subr.mxu0 0.0
    %101 = vmatpush1.msra.mxu0 0.0
    %102 = vmatprep.subr.mxu0 0.0
    %103 = vmatpush1.msra.mxu0 0.0
    %104 = vmatprep.subr.mxu0 0.0
    %105 = vmatpush1.msra.mxu0 0.0
    %106 = vmatprep.subr.mxu0 0.0
    %107 = vmatpush1.msra.mxu0 0.0
    %108 = vmatprep.subr.mxu0 0.0
    %109 = vmatpush1.msra.mxu0 0.0
    %110 = vmatprep.subr.mxu0 0.0
    %111 = vmatpush1.msra.mxu0 0.0
    %112 = vmatprep.subr.mxu0 0.0
    %113 = vmatpush1.msra.mxu0 0.0
    %114 = vmatprep.mubr.f32.mxu0 0.0
    %115 = vmatmul.mubr.f32.gmra.mrb[0].mxu0 %v48
    %v116 = vpop.f32.mrb[0].mxu0
    %v117 = vadd.f32 0.0, %v116
    %v118 = vpop.f32.mrb[0].mxu0
    %119 = vdwg.mxu0
    %v120 = vmul.f32 %v117, 0.0017677669
    %v121 = vld [vmem:[%s2] sm:$0x1]
    %v122 = vmul.f32 %v121, 0.01
    %v124 = vlaneseq
    %v125 = vshrl.u32 %v124, 7
    %v126 = vsub.s32 0, %v125
    %v127 = vrot.slane %v122, %v126
    %v129 = vadd.f32 %v120, %v127
    %130 = vst [vmem:[#allocation7] sm:$0xff] %v129
    // Predicated region
    $region22: #{tpu_custom_call.1} parent=1 // pred_check
      _
    $region23: #{tpu_custom_call.1} parent=1 // pred_check_branch
      %132 = sbr.rel (0) target = $region25
    $region24: #{tpu_custom_call.1} parent=1 // pred_region
      %s134 = ssub.s32 128, 128
      %135 = vsyncadd [#allocation4], %s134
      %s137 = sshll.u32 [#allocation7], 4
      %s138 = int_to_ptr.vmem [resolvable:$true] %s137
      %140 = dma.vmem_to_hbm [thread:$0]  %s138, 128, %s3, [#allocation4]
    $region25: #{tpu_custom_call.1} parent=1 // pred_fallthru
      _
    // Predicated region
    $region26: #{tpu_custom_call.1} parent=1 // pred_check
      _
    $region27: #{tpu_custom_call.1} parent=1 // pred_check_branch
      %142 = sbr.rel (0) target = $region29
    $region28: #{tpu_custom_call.1} parent=1 // pred_region
      %143 = dma.done [#allocation4], 128
    $region29: #{tpu_custom_call.1} parent=1 // pred_fallthru
      _
    %144 = vsyncpa [#allocation3], 1
    %145 = vsyncpa [#allocation6], 1
    %146 = vsyncpa [#allocation4], 1

</llo_original>
